<compile_context>
chip_gen: v5e
topology: v5e:2x2
jax: 0.10.0
libtpu: 0.0.40
codegen_flags: <defaults>
</compile_context>

<pallas_src>
import functools

import jax
import jax.numpy as jnp
import numpy as np
from jax.experimental import pallas as pl
from jax.experimental.pallas import tpu as pltpu


def unet_up_kernel(x_ref, w_ref, o_ref, *, H, W):
    # x_ref: (1, Cin, (H+3)*(W+2))   zero-padded input, spatially flattened (f32 or bf16)
    # w_ref: (2, 2, Ct, 4*Cin)       per-parity K-concatenated tap weight matrices
    # o_ref: (1, 2, 2, Ct, H*(W+2))  conv + InstanceNorm + ReLU, parity-decomposed;
    #                                lanes t = p*(W+2)+q with q >= W are pad garbage
    #                                (excluded from stats, cropped in the wrapper).
    Wp = W + 2
    L = H * Wp
    Ct = w_ref.shape[2]
    f32 = jnp.float32

    xv = x_ref[0]                                          # (Cin, S_in)

    # the 9 lane-shifted views of the padded input (traced once, reused by the K-concats)
    zs = {(i, j): xv[:, i * Wp + j: i * Wp + j + L] for i in range(3) for j in range(3)}

    # InstanceNorm statistics exclude the 2 pad lanes of every (W+2)-wide row
    col = jax.lax.broadcasted_iota(jnp.int32, (1, L), 1) % Wp
    valid = (col < W).astype(f32)                          # (1, L), broadcast over Ct

    s = jnp.zeros((Ct, 1), f32)
    ss = jnp.zeros((Ct, 1), f32)

    # --- transposed conv: ONE K-fused MXU dot per parity (K = 4*Cin); per-channel
    #     sum / sum-of-squares in the same pass; raw activations staged in o_ref ---
    for a in range(2):
        for b in range(2):
            z = jnp.concatenate([zs[(a + dh, b + dw)]
                                 for dh in range(2) for dw in range(2)], axis=0)
            y = jnp.dot(w_ref[a, b], z, preferred_element_type=f32)   # (Ct, L)
            yv = y * valid
            s = s + jnp.sum(yv, axis=1, keepdims=True)
            ss = ss + jnp.sum(yv * y, axis=1, keepdims=True)
            o_ref[0, a, b] = y.astype(o_ref.dtype)

    # --- InstanceNorm2d (biased variance, eps=1e-5) + ReLU, normalized in place ---
    inv_n = 1.0 / (4.0 * H * W)
    mean = s * inv_n                                       # (Ct, 1)
    var = ss * inv_n - mean * mean                         # one-pass variance, f32
    inv = jax.lax.rsqrt(var + 1e-5)                        # (Ct, 1)
    shift = mean * inv                                     # hoisted out of the loop below
    # NOTE: inv/shift stay (Ct, 1): Mosaic keeps the lane-broadcast in a replicated
    # layout, so materializing explicit (Ct, L) copies would only add VMEM pressure.
    for a in range(2):
        for b in range(2):
            y = o_ref[0, a, b].astype(f32)
            o_ref[0, a, b] = jnp.maximum(y * inv - shift, 0.0).astype(o_ref.dtype)


def unet_up(x, skip, weight, *, mxu_dtype=jnp.float32, out_dtype=None):
    """UNetUp forward.  x: (N, Cin, H, W), skip: (N, Cs, 2H, 2W),
    weight: ConvTranspose2d weight (Cin, Cout, 4, 4) (bias=False).
    Returns (N, Cout + Cs, 2H, 2W).

    mxu_dtype=jnp.bfloat16 halves x/weight DMA bytes and is MXU-native on every TPU
    generation (v5e included); accumulation and InstanceNorm stats stay f32.
    out_dtype=jnp.bfloat16 halves the dominant output HBM write and the wrapper
    repack/concat traffic (at bf16 output precision)."""
    N, Cin, H, W = x.shape
    Cout = weight.shape[1]
    if out_dtype is None:
        out_dtype = x.dtype
    Wp = W + 2
    L = H * Wp
    S_in = (H + 3) * Wp            # halo: 1 top / 2 bottom / 1 left / 1 right zero pad

    mxu_b = jnp.dtype(mxu_dtype).itemsize
    out_b = jnp.dtype(out_dtype).itemsize

    # Zero-pad Cin to the sublane tile so the in-kernel K-concat slices stay aligned.
    # Extra channels are exact zeros in both x and weight -> contribute nothing.
    cin_tile = 16 if mxu_b == 2 else 8
    Cin_p = -(-Cin // cin_tile) * cin_tile

    # cast BEFORE padding (single pad round-trip); channel pad + conv halo in one jnp.pad
    xp = jnp.pad(x.astype(mxu_dtype),
                 ((0, 0), (0, Cin_p - Cin), (1, 2), (1, 1))).reshape(N, Cin_p, S_in)

    # ConvTranspose2d(k=4, s=2, p=1):
    #   out[2p+a, 2q+b] = sum_{dh,dw,ci} xpad[ci, p+a+dh, q+b+dw] * W[ci, :, K[a][dh], K[b][dw]]
    Kidx = ((3, 1), (2, 0))
    wpad = jnp.pad(weight, ((0, Cin_p - Cin), (0, 0), (0, 0), (0, 0)))
    wk = jnp.stack([
        jnp.stack([
            jnp.concatenate([wpad[:, :, Kidx[a][dh], Kidx[b][dw]].T      # (Cout, Cin_p)
                             for dh in range(2) for dw in range(2)], axis=1)
            for b in range(2)], axis=0)
        for a in range(2)], axis=0).astype(mxu_dtype)                    # (2, 2, Cout, 4*Cin_p)

    # ---- generation-aware VMEM budget (v7x has 64 MiB/TC, v5e/v6e 128 MiB) ----
    try:
        vmem_cap = int(pltpu.get_tpu_info().vmem_capacity_bytes)
    except Exception:
        vmem_cap = 64 * 1024 * 1024            # conservative (v7x-sized) fallback
    vmem_limit = max(32 * 1024 * 1024,
                     min(100 * 1024 * 1024, (vmem_cap * 3) // 4))

    def vmem_estimate(tc):
        out_blk = 2 * 4 * tc * L * out_b                    # double-buffered output block
        in_blk = 2 * Cin_p * S_in * mxu_b                   # double-buffered x block
        w_blk = 2 * 16 * tc * Cin_p * mxu_b                 # double-buffered weight block
        tmp = 13 * Cin_p * L * mxu_b + 2 * tc * L * 4       # shifted views + concat + live f32 y
        return out_blk + in_blk + w_blk + tmp

    # ---- Cout tile: largest MXU-friendly divisor that fits the VMEM budget ----
    cands = sorted({c for c in (512, 256, 128, 64, 32, 16) if c < Cout and Cout % c == 0}
                   | {Cout}, reverse=True)
    tc = next((c for c in cands if vmem_estimate(c) <= vmem_limit), cands[-1])
    if N == 1:                                 # >= 2 parallel grid steps for v7x's 2 TCs
        tc = next((c for c in cands
                   if c <= Cout // 2 and vmem_estimate(c) <= vmem_limit), tc)
    n_ct = Cout // tc

    # ---- grid order by operand residency: minimize re-streamed HBM bytes ----
    restream_w = (N - 1) * 16 * Cout * Cin_p        # n outer, c inner: weights refetched per n
    restream_x = (n_ct - 1) * N * Cin_p * S_in      # c outer, n inner: x refetched per c-tile
    if restream_w <= restream_x:
        grid = (N, n_ct)
        x_map = lambda n, c: (n, 0, 0)
        w_map = lambda n, c: (0, 0, c, 0)
        o_map = lambda n, c: (n, 0, 0, c, 0)
    else:
        grid = (n_ct, N)
        x_map = lambda c, n: (n, 0, 0)
        w_map = lambda c, n: (0, 0, c, 0)
        o_map = lambda c, n: (n, 0, 0, c, 0)

    out_dec = pl.pallas_call(
        functools.partial(unet_up_kernel, H=H, W=W),
        out_shape=jax.ShapeDtypeStruct((N, 2, 2, Cout, L), out_dtype),
        grid=grid,
        in_specs=[
            pl.BlockSpec((1, Cin_p, S_in), x_map),
            pl.BlockSpec((2, 2, tc, 4 * Cin_p), w_map),
        ],
        out_specs=pl.BlockSpec((1, 2, 2, tc, L), o_map),
        compiler_params=pltpu.CompilerParams(
            # per-(image, channel-tile) InstanceNorm stats are independent -> fully parallel
            dimension_semantics=("parallel", "parallel"),
            vmem_limit_bytes=int(vmem_limit),
        ),
    )(xp, wk)

    # drop the per-row pad lanes, re-interleave parities -> (N, Cout, 2H, 2W),
    # then concatenate the untouched skip tensor along channels (outside the kernel).
    y = out_dec.reshape(N, 2, 2, Cout, H, Wp)[..., :W]     # (N, 2, 2, Cout, H, W)
    y = y.transpose(0, 3, 4, 1, 5, 2).reshape(N, Cout, 2 * H, 2 * W)
    return jnp.concatenate([y, skip.astype(y.dtype)], axis=1)


def reference(x, skip, weight):
    """Pure-JAX reference matching PyTorch UNetUp (dropout=0.0)."""
    wf = jnp.transpose(jnp.flip(weight, axis=(2, 3)), (1, 0, 2, 3))  # OIHW, spatially flipped
    y = jax.lax.conv_general_dilated(
        x, wf, window_strides=(1, 1), padding=[(2, 2), (2, 2)],
        lhs_dilation=(2, 2), dimension_numbers=("NCHW", "OIHW", "NCHW"),
    )
    mean = jnp.mean(y, axis=(2, 3), keepdims=True)
    var = jnp.mean((y - mean) ** 2, axis=(2, 3), keepdims=True)
    y = jnp.maximum((y - mean) * jax.lax.rsqrt(var + 1e-5), 0.0)
    return jnp.concatenate([y, skip], axis=1)


if __name__ == "__main__":
    # TODO(synk): dropout branch (dropout > 0) is not instantiated here; module default is 0.0.
    key = jax.random.PRNGKey(0)
    k1, k2, k3 = jax.random.split(key, 3)
    N, Cin, Cout, Cs, H, W = 2, 4, 8, 8, 16, 16

    x = jax.random.normal(k1, (N, Cin, H, W), dtype=jnp.float32)
    skip = jax.random.normal(k2, (N, Cs, 2 * H, 2 * W), dtype=jnp.float32)
    # deterministic synthetic ConvTranspose2d weight: (in_size, out_size, 4, 4), bias=False
    weight = 0.1 * jax.random.normal(k3, (Cin, Cout, 4, 4), dtype=jnp.float32)

    ref = reference(x, skip, weight)

    # f32 path (tolerance covers generation-dependent MXU f32 emulation)
    out = jax.block_until_ready(unet_up(x, skip, weight))
    assert out.shape == (N, Cout + Cs, 2 * H, 2 * W), out.shape
    np.testing.assert_allclose(np.asarray(out), np.asarray(ref), rtol=2e-2, atol=2e-2)

    # bf16 MXU inputs + bf16 output (review: bf16 I/O on all generations); stats stay f32
    out_bf = jax.block_until_ready(
        unet_up(x, skip, weight, mxu_dtype=jnp.bfloat16, out_dtype=jnp.bfloat16))
    np.testing.assert_allclose(np.asarray(out_bf.astype(jnp.float32)), np.asarray(ref),
                               rtol=1e-1, atol=1e-1)

    print("KERNEL_OK")
</pallas_src>

<mosaic_0001>
module attributes {stable_mosaic.version = 11 : i64} {
  func.func @unet_up_kernel(%arg0: i32, %arg1: i32, %arg2: memref<1x8x342xf32, #tpu.memory_space<vmem>>, %arg3: memref<2x2x8x32xf32, #tpu.memory_space<vmem>>, %arg4: memref<1x2x2x8x288xf32, #tpu.memory_space<vmem>>) attributes {dimension_semantics = [#tpu.dimension_semantics<parallel>, #tpu.dimension_semantics<parallel>], iteration_bounds = array<i64: 1, 2>, scalar_prefetch = 0 : i64, scratch_operands = 0 : i64, tpu.core_type = #tpu.core_type<tc>, window_params = [{transform_indices = @transform_0, window_bounds = array<i64: 1, 8, 342>}, {transform_indices = @transform_1, window_bounds = array<i64: 2, 2, 8, 32>}, {transform_indices = @transform_2, window_bounds = array<i64: 1, 2, 2, 8, 288>}]} {
    %c0 = arith.constant 0 : index
    %c0_0 = arith.constant 0 : index
    %c0_1 = arith.constant 0 : index
    %0 = vector.load %arg2[%c0, %c0_0, %c0_1] : memref<1x8x342xf32, #tpu.memory_space<vmem>>, vector<1x8x342xf32>
    %1 = vector.shape_cast %0 : vector<1x8x342xf32> to vector<8x342xf32>
    %2 = vector.extract_strided_slice %1 {offsets = [0, 0], sizes = [8, 288], strides = [1, 1]} : vector<8x342xf32> to vector<8x288xf32>
    %3 = vector.extract_strided_slice %1 {offsets = [0, 1], sizes = [8, 288], strides = [1, 1]} : vector<8x342xf32> to vector<8x288xf32>
    %4 = vector.extract_strided_slice %1 {offsets = [0, 2], sizes = [8, 288], strides = [1, 1]} : vector<8x342xf32> to vector<8x288xf32>
    %5 = vector.extract_strided_slice %1 {offsets = [0, 18], sizes = [8, 288], strides = [1, 1]} : vector<8x342xf32> to vector<8x288xf32>
    %6 = vector.extract_strided_slice %1 {offsets = [0, 19], sizes = [8, 288], strides = [1, 1]} : vector<8x342xf32> to vector<8x288xf32>
    %7 = vector.extract_strided_slice %1 {offsets = [0, 20], sizes = [8, 288], strides = [1, 1]} : vector<8x342xf32> to vector<8x288xf32>
    %8 = vector.extract_strided_slice %1 {offsets = [0, 36], sizes = [8, 288], strides = [1, 1]} : vector<8x342xf32> to vector<8x288xf32>
    %9 = vector.extract_strided_slice %1 {offsets = [0, 37], sizes = [8, 288], strides = [1, 1]} : vector<8x342xf32> to vector<8x288xf32>
    %10 = vector.extract_strided_slice %1 {offsets = [0, 38], sizes = [8, 288], strides = [1, 1]} : vector<8x342xf32> to vector<8x288xf32>
    %11 = tpu.iota {dimensions = array<i32: 1>} : vector<1x288xi32>
    %c18_i32 = arith.constant 18 : i32
    %c0_i32 = arith.constant 0 : i32
    %12 = arith.cmpi eq, %c18_i32, %c0_i32 : i32
    %c1_i32 = arith.constant 1 : i32
    %13 = arith.select %12, %c1_i32, %c18_i32 : i32
    %14 = vector.broadcast %13 : i32 to vector<1x288xi32>
    %15 = arith.remsi %11, %14 : vector<1x288xi32>
    %c0_i32_2 = arith.constant 0 : i32
    %16 = vector.broadcast %c0_i32_2 : i32 to vector<1x288xi32>
    %17 = arith.cmpi ne, %15, %16 : vector<1x288xi32>
    %c0_i32_3 = arith.constant 0 : i32
    %18 = vector.broadcast %c0_i32_3 : i32 to vector<1x288xi32>
    %19 = arith.cmpi slt, %15, %18 : vector<1x288xi32>
    %c0_i32_4 = arith.constant 0 : i32
    %20 = arith.cmpi slt, %13, %c0_i32_4 : i32
    %21 = vector.broadcast %20 : i1 to vector<1x288xi1>
    %22 = vector.broadcast %21 : vector<1x288xi1> to vector<1x288xi1>
    %23 = arith.xori %19, %22 : vector<1x288xi1>
    %24 = arith.andi %23, %17 : vector<1x288xi1>
    %25 = vector.broadcast %13 : i32 to vector<1x288xi32>
    %26 = arith.addi %15, %25 : vector<1x288xi32>
    %27 = arith.select %24, %26, %15 : vector<1x288xi1>, vector<1x288xi32>
    %c16_i32 = arith.constant 16 : i32
    %28 = vector.broadcast %c16_i32 : i32 to vector<1x288xi32>
    %29 = arith.cmpi slt, %27, %28 : vector<1x288xi32>
    %30 = arith.extui %29 : vector<1x288xi1> to vector<1x288xi32>
    %31 = arith.sitofp %30 : vector<1x288xi32> to vector<1x288xf32>
    %cst = arith.constant 0.000000e+00 : f32
    %32 = vector.broadcast %cst : f32 to vector<8x1xf32>
    %cst_5 = arith.constant 0.000000e+00 : f32
    %33 = vector.broadcast %cst_5 : f32 to vector<8x1xf32>
    %34 = tpu.concatenate %2, %3, %5, %6 in 0 : vector<8x288xf32>, vector<8x288xf32>, vector<8x288xf32>, vector<8x288xf32> -> vector<32x288xf32>
    %c0_6 = arith.constant 0 : index
    %c0_7 = arith.constant 0 : index
    %c0_8 = arith.constant 0 : index
    %c0_9 = arith.constant 0 : index
    %35 = vector.load %arg3[%c0_6, %c0_7, %c0_8, %c0_9] : memref<2x2x8x32xf32, #tpu.memory_space<vmem>>, vector<1x1x8x32xf32>
    %36 = vector.shape_cast %35 : vector<1x1x8x32xf32> to vector<8x32xf32>
    %cst_10 = arith.constant dense<0.000000e+00> : vector<8x288xf32>
    %37 = tpu.matmul %36, %34, %cst_10 {dimension_numbers = #tpu.dot_dimension_numbers<[1], [0], [0], [1], [0, 0, 1, 1], [], []>} : vector<8x32xf32>, vector<32x288xf32>, vector<8x288xf32> -> vector<8x288xf32>
    %38 = vector.broadcast %31 : vector<1x288xf32> to vector<8x288xf32>
    %39 = arith.mulf %37, %38 : vector<8x288xf32>
    %cst_11 = arith.constant dense<0.000000e+00> : vector<8xf32>
    %40 = vector.multi_reduction <add>, %39, %cst_11 [1] : vector<8x288xf32> to vector<8xf32>
    %41 = vector.shape_cast %40 : vector<8xf32> to vector<8x1xf32>
    %42 = arith.addf %32, %41 : vector<8x1xf32>
    %43 = arith.mulf %39, %37 : vector<8x288xf32>
    %cst_12 = arith.constant dense<0.000000e+00> : vector<8xf32>
    %44 = vector.multi_reduction <add>, %43, %cst_12 [1] : vector<8x288xf32> to vector<8xf32>
    %45 = vector.shape_cast %44 : vector<8xf32> to vector<8x1xf32>
    %46 = arith.addf %33, %45 : vector<8x1xf32>
    %c0_13 = arith.constant 0 : index
    %c0_14 = arith.constant 0 : index
    %c0_15 = arith.constant 0 : index
    %c0_16 = arith.constant 0 : index
    %c0_17 = arith.constant 0 : index
    %47 = vector.load %arg4[%c0_13, %c0_14, %c0_15, %c0_16, %c0_17] : memref<1x2x2x8x288xf32, #tpu.memory_space<vmem>>, vector<1x1x1x8x288xf32>
    %48 = vector.shape_cast %47 : vector<1x1x1x8x288xf32> to vector<8x288xf32>
    %49 = vector.shape_cast %37 : vector<8x288xf32> to vector<1x1x1x8x288xf32>
    tpu.vector_store %arg4[%c0_13, %c0_14, %c0_15, %c0_16, %c0_17], %49 {strides = array<i32>} : memref<1x2x2x8x288xf32, #tpu.memory_space<vmem>>, vector<1x1x1x8x288xf32>,
    %50 = tpu.concatenate %3, %4, %6, %7 in 0 : vector<8x288xf32>, vector<8x288xf32>, vector<8x288xf32>, vector<8x288xf32> -> vector<32x288xf32>
    %c0_18 = arith.constant 0 : index
    %c1 = arith.constant 1 : index
    %c0_19 = arith.constant 0 : index
    %c0_20 = arith.constant 0 : index
    %51 = vector.load %arg3[%c0_18, %c1, %c0_19, %c0_20] : memref<2x2x8x32xf32, #tpu.memory_space<vmem>>, vector<1x1x8x32xf32>
    %52 = vector.shape_cast %51 : vector<1x1x8x32xf32> to vector<8x32xf32>
    %cst_21 = arith.constant dense<0.000000e+00> : vector<8x288xf32>
    %53 = tpu.matmul %52, %50, %cst_21 {dimension_numbers = #tpu.dot_dimension_numbers<[1], [0], [0], [1], [0, 0, 1, 1], [], []>} : vector<8x32xf32>, vector<32x288xf32>, vector<8x288xf32> -> vector<8x288xf32>
    %54 = vector.broadcast %31 : vector<1x288xf32> to vector<8x288xf32>
    %55 = arith.mulf %53, %54 : vector<8x288xf32>
    %cst_22 = arith.constant dense<0.000000e+00> : vector<8xf32>
    %56 = vector.multi_reduction <add>, %55, %cst_22 [1] : vector<8x288xf32> to vector<8xf32>
    %57 = vector.shape_cast %56 : vector<8xf32> to vector<8x1xf32>
    %58 = arith.addf %42, %57 : vector<8x1xf32>
    %59 = arith.mulf %55, %53 : vector<8x288xf32>
    %cst_23 = arith.constant dense<0.000000e+00> : vector<8xf32>
    %60 = vector.multi_reduction <add>, %59, %cst_23 [1] : vector<8x288xf32> to vector<8xf32>
    %61 = vector.shape_cast %60 : vector<8xf32> to vector<8x1xf32>
    %62 = arith.addf %46, %61 : vector<8x1xf32>
    %c0_24 = arith.constant 0 : index
    %c0_25 = arith.constant 0 : index
    %c1_26 = arith.constant 1 : index
    %c0_27 = arith.constant 0 : index
    %c0_28 = arith.constant 0 : index
    %63 = vector.load %arg4[%c0_24, %c0_25, %c1_26, %c0_27, %c0_28] : memref<1x2x2x8x288xf32, #tpu.memory_space<vmem>>, vector<1x1x1x8x288xf32>
    %64 = vector.shape_cast %63 : vector<1x1x1x8x288xf32> to vector<8x288xf32>
    %65 = vector.shape_cast %53 : vector<8x288xf32> to vector<1x1x1x8x288xf32>
    tpu.vector_store %arg4[%c0_24, %c0_25, %c1_26, %c0_27, %c0_28], %65 {strides = array<i32>} : memref<1x2x2x8x288xf32, #tpu.memory_space<vmem>>, vector<1x1x1x8x288xf32>,
    %66 = tpu.concatenate %5, %6, %8, %9 in 0 : vector<8x288xf32>, vector<8x288xf32>, vector<8x288xf32>, vector<8x288xf32> -> vector<32x288xf32>
    %c1_29 = arith.constant 1 : index
    %c0_30 = arith.constant 0 : index
    %c0_31 = arith.constant 0 : index
    %c0_32 = arith.constant 0 : index
    %67 = vector.load %arg3[%c1_29, %c0_30, %c0_31, %c0_32] : memref<2x2x8x32xf32, #tpu.memory_space<vmem>>, vector<1x1x8x32xf32>
    %68 = vector.shape_cast %67 : vector<1x1x8x32xf32> to vector<8x32xf32>
    %cst_33 = arith.constant dense<0.000000e+00> : vector<8x288xf32>
    %69 = tpu.matmul %68, %66, %cst_33 {dimension_numbers = #tpu.dot_dimension_numbers<[1], [0], [0], [1], [0, 0, 1, 1], [], []>} : vector<8x32xf32>, vector<32x288xf32>, vector<8x288xf32> -> vector<8x288xf32>
    %70 = vector.broadcast %31 : vector<1x288xf32> to vector<8x288xf32>
    %71 = arith.mulf %69, %70 : vector<8x288xf32>
    %cst_34 = arith.constant dense<0.000000e+00> : vector<8xf32>
    %72 = vector.multi_reduction <add>, %71, %cst_34 [1] : vector<8x288xf32> to vector<8xf32>
    %73 = vector.shape_cast %72 : vector<8xf32> to vector<8x1xf32>
    %74 = arith.addf %58, %73 : vector<8x1xf32>
    %75 = arith.mulf %71, %69 : vector<8x288xf32>
    %cst_35 = arith.constant dense<0.000000e+00> : vector<8xf32>
    %76 = vector.multi_reduction <add>, %75, %cst_35 [1] : vector<8x288xf32> to vector<8xf32>
    %77 = vector.shape_cast %76 : vector<8xf32> to vector<8x1xf32>
    %78 = arith.addf %62, %77 : vector<8x1xf32>
    %c0_36 = arith.constant 0 : index
    %c1_37 = arith.constant 1 : index
    %c0_38 = arith.constant 0 : index
    %c0_39 = arith.constant 0 : index
    %c0_40 = arith.constant 0 : index
    %79 = vector.load %arg4[%c0_36, %c1_37, %c0_38, %c0_39, %c0_40] : memref<1x2x2x8x288xf32, #tpu.memory_space<vmem>>, vector<1x1x1x8x288xf32>
    %80 = vector.shape_cast %79 : vector<1x1x1x8x288xf32> to vector<8x288xf32>
    %81 = vector.shape_cast %69 : vector<8x288xf32> to vector<1x1x1x8x288xf32>
    tpu.vector_store %arg4[%c0_36, %c1_37, %c0_38, %c0_39, %c0_40], %81 {strides = array<i32>} : memref<1x2x2x8x288xf32, #tpu.memory_space<vmem>>, vector<1x1x1x8x288xf32>,
    %82 = tpu.concatenate %6, %7, %9, %10 in 0 : vector<8x288xf32>, vector<8x288xf32>, vector<8x288xf32>, vector<8x288xf32> -> vector<32x288xf32>
    %c1_41 = arith.constant 1 : index
    %c1_42 = arith.constant 1 : index
    %c0_43 = arith.constant 0 : index
    %c0_44 = arith.constant 0 : index
    %83 = vector.load %arg3[%c1_41, %c1_42, %c0_43, %c0_44] : memref<2x2x8x32xf32, #tpu.memory_space<vmem>>, vector<1x1x8x32xf32>
    %84 = vector.shape_cast %83 : vector<1x1x8x32xf32> to vector<8x32xf32>
    %cst_45 = arith.constant dense<0.000000e+00> : vector<8x288xf32>
    %85 = tpu.matmul %84, %82, %cst_45 {dimension_numbers = #tpu.dot_dimension_numbers<[1], [0], [0], [1], [0, 0, 1, 1], [], []>} : vector<8x32xf32>, vector<32x288xf32>, vector<8x288xf32> -> vector<8x288xf32>
    %86 = vector.broadcast %31 : vector<1x288xf32> to vector<8x288xf32>
    %87 = arith.mulf %85, %86 : vector<8x288xf32>
    %cst_46 = arith.constant dense<0.000000e+00> : vector<8xf32>
    %88 = vector.multi_reduction <add>, %87, %cst_46 [1] : vector<8x288xf32> to vector<8xf32>
    %89 = vector.shape_cast %88 : vector<8xf32> to vector<8x1xf32>
    %90 = arith.addf %74, %89 : vector<8x1xf32>
    %91 = arith.mulf %87, %85 : vector<8x288xf32>
    %cst_47 = arith.constant dense<0.000000e+00> : vector<8xf32>
    %92 = vector.multi_reduction <add>, %91, %cst_47 [1] : vector<8x288xf32> to vector<8xf32>
    %93 = vector.shape_cast %92 : vector<8xf32> to vector<8x1xf32>
    %94 = arith.addf %78, %93 : vector<8x1xf32>
    %c0_48 = arith.constant 0 : index
    %c1_49 = arith.constant 1 : index
    %c1_50 = arith.constant 1 : index
    %c0_51 = arith.constant 0 : index
    %c0_52 = arith.constant 0 : index
    %95 = vector.load %arg4[%c0_48, %c1_49, %c1_50, %c0_51, %c0_52] : memref<1x2x2x8x288xf32, #tpu.memory_space<vmem>>, vector<1x1x1x8x288xf32>
    %96 = vector.shape_cast %95 : vector<1x1x1x8x288xf32> to vector<8x288xf32>
    %97 = vector.shape_cast %85 : vector<8x288xf32> to vector<1x1x1x8x288xf32>
    tpu.vector_store %arg4[%c0_48, %c1_49, %c1_50, %c0_51, %c0_52], %97 {strides = array<i32>} : memref<1x2x2x8x288xf32, #tpu.memory_space<vmem>>, vector<1x1x1x8x288xf32>,
    %cst_53 = arith.constant 9.765625E-4 : f32
    %98 = vector.broadcast %cst_53 : f32 to vector<8x1xf32>
    %99 = arith.mulf %90, %98 : vector<8x1xf32>
    %cst_54 = arith.constant 9.765625E-4 : f32
    %100 = vector.broadcast %cst_54 : f32 to vector<8x1xf32>
    %101 = arith.mulf %94, %100 : vector<8x1xf32>
    %102 = arith.mulf %99, %99 : vector<8x1xf32>
    %103 = arith.subf %101, %102 : vector<8x1xf32>
    %cst_55 = arith.constant 9.99999974E-6 : f32
    %104 = vector.broadcast %cst_55 : f32 to vector<8x1xf32>
    %105 = arith.addf %103, %104 : vector<8x1xf32>
    %106 = math.rsqrt %105 : vector<8x1xf32>
    %107 = arith.mulf %99, %106 : vector<8x1xf32>
    %c0_56 = arith.constant 0 : index
    %c0_57 = arith.constant 0 : index
    %c0_58 = arith.constant 0 : index
    %c0_59 = arith.constant 0 : index
    %c0_60 = arith.constant 0 : index
    %108 = vector.load %arg4[%c0_56, %c0_57, %c0_58, %c0_59, %c0_60] : memref<1x2x2x8x288xf32, #tpu.memory_space<vmem>>, vector<1x1x1x8x288xf32>
    %109 = vector.shape_cast %108 : vector<1x1x1x8x288xf32> to vector<8x288xf32>
    %110 = vector.broadcast %106 : vector<8x1xf32> to vector<8x288xf32>
    %111 = arith.mulf %109, %110 : vector<8x288xf32>
    %112 = vector.broadcast %107 : vector<8x1xf32> to vector<8x288xf32>
    %113 = arith.subf %111, %112 : vector<8x288xf32>
    %cst_61 = arith.constant 0.000000e+00 : f32
    %114 = vector.broadcast %cst_61 : f32 to vector<8x288xf32>
    %115 = arith.maximumf %113, %114 : vector<8x288xf32>
    %c0_62 = arith.constant 0 : index
    %c0_63 = arith.constant 0 : index
    %c0_64 = arith.constant 0 : index
    %c0_65 = arith.constant 0 : index
    %c0_66 = arith.constant 0 : index
    %116 = vector.load %arg4[%c0_62, %c0_63, %c0_64, %c0_65, %c0_66] : memref<1x2x2x8x288xf32, #tpu.memory_space<vmem>>, vector<1x1x1x8x288xf32>
    %117 = vector.shape_cast %116 : vector<1x1x1x8x288xf32> to vector<8x288xf32>
    %118 = vector.shape_cast %115 : vector<8x288xf32> to vector<1x1x1x8x288xf32>
    tpu.vector_store %arg4[%c0_62, %c0_63, %c0_64, %c0_65, %c0_66], %118 {strides = array<i32>} : memref<1x2x2x8x288xf32, #tpu.memory_space<vmem>>, vector<1x1x1x8x288xf32>,
    %c0_67 = arith.constant 0 : index
    %c0_68 = arith.constant 0 : index
    %c1_69 = arith.constant 1 : index
    %c0_70 = arith.constant 0 : index
    %c0_71 = arith.constant 0 : index
    %119 = vector.load %arg4[%c0_67, %c0_68, %c1_69, %c0_70, %c0_71] : memref<1x2x2x8x288xf32, #tpu.memory_space<vmem>>, vector<1x1x1x8x288xf32>
    %120 = vector.shape_cast %119 : vector<1x1x1x8x288xf32> to vector<8x288xf32>
    %121 = vector.broadcast %106 : vector<8x1xf32> to vector<8x288xf32>
    %122 = arith.mulf %120, %121 : vector<8x288xf32>
    %123 = vector.broadcast %107 : vector<8x1xf32> to vector<8x288xf32>
    %124 = arith.subf %122, %123 : vector<8x288xf32>
    %cst_72 = arith.constant 0.000000e+00 : f32
    %125 = vector.broadcast %cst_72 : f32 to vector<8x288xf32>
    %126 = arith.maximumf %124, %125 : vector<8x288xf32>
    %c0_73 = arith.constant 0 : index
    %c0_74 = arith.constant 0 : index
    %c1_75 = arith.constant 1 : index
    %c0_76 = arith.constant 0 : index
    %c0_77 = arith.constant 0 : index
    %127 = vector.load %arg4[%c0_73, %c0_74, %c1_75, %c0_76, %c0_77] : memref<1x2x2x8x288xf32, #tpu.memory_space<vmem>>, vector<1x1x1x8x288xf32>
    %128 = vector.shape_cast %127 : vector<1x1x1x8x288xf32> to vector<8x288xf32>
    %129 = vector.shape_cast %126 : vector<8x288xf32> to vector<1x1x1x8x288xf32>
    tpu.vector_store %arg4[%c0_73, %c0_74, %c1_75, %c0_76, %c0_77], %129 {strides = array<i32>} : memref<1x2x2x8x288xf32, #tpu.memory_space<vmem>>, vector<1x1x1x8x288xf32>,
    %c0_78 = arith.constant 0 : index
    %c1_79 = arith.constant 1 : index
    %c0_80 = arith.constant 0 : index
    %c0_81 = arith.constant 0 : index
    %c0_82 = arith.constant 0 : index
    %130 = vector.load %arg4[%c0_78, %c1_79, %c0_80, %c0_81, %c0_82] : memref<1x2x2x8x288xf32, #tpu.memory_space<vmem>>, vector<1x1x1x8x288xf32>
    %131 = vector.shape_cast %130 : vector<1x1x1x8x288xf32> to vector<8x288xf32>
    %132 = vector.broadcast %106 : vector<8x1xf32> to vector<8x288xf32>
    %133 = arith.mulf %131, %132 : vector<8x288xf32>
    %134 = vector.broadcast %107 : vector<8x1xf32> to vector<8x288xf32>
    %135 = arith.subf %133, %134 : vector<8x288xf32>
    %cst_83 = arith.constant 0.000000e+00 : f32
    %136 = vector.broadcast %cst_83 : f32 to vector<8x288xf32>
    %137 = arith.maximumf %135, %136 : vector<8x288xf32>
    %c0_84 = arith.constant 0 : index
    %c1_85 = arith.constant 1 : index
    %c0_86 = arith.constant 0 : index
    %c0_87 = arith.constant 0 : index
    %c0_88 = arith.constant 0 : index
    %138 = vector.load %arg4[%c0_84, %c1_85, %c0_86, %c0_87, %c0_88] : memref<1x2x2x8x288xf32, #tpu.memory_space<vmem>>, vector<1x1x1x8x288xf32>
    %139 = vector.shape_cast %138 : vector<1x1x1x8x288xf32> to vector<8x288xf32>
    %140 = vector.shape_cast %137 : vector<8x288xf32> to vector<1x1x1x8x288xf32>
    tpu.vector_store %arg4[%c0_84, %c1_85, %c0_86, %c0_87, %c0_88], %140 {strides = array<i32>} : memref<1x2x2x8x288xf32, #tpu.memory_space<vmem>>, vector<1x1x1x8x288xf32>,
    %c0_89 = arith.constant 0 : index
    %c1_90 = arith.constant 1 : index
    %c1_91 = arith.constant 1 : index
    %c0_92 = arith.constant 0 : index
    %c0_93 = arith.constant 0 : index
    %141 = vector.load %arg4[%c0_89, %c1_90, %c1_91, %c0_92, %c0_93] : memref<1x2x2x8x288xf32, #tpu.memory_space<vmem>>, vector<1x1x1x8x288xf32>
    %142 = vector.shape_cast %141 : vector<1x1x1x8x288xf32> to vector<8x288xf32>
    %143 = vector.broadcast %106 : vector<8x1xf32> to vector<8x288xf32>
    %144 = arith.mulf %142, %143 : vector<8x288xf32>
    %145 = vector.broadcast %107 : vector<8x1xf32> to vector<8x288xf32>
    %146 = arith.subf %144, %145 : vector<8x288xf32>
    %cst_94 = arith.constant 0.000000e+00 : f32
    %147 = vector.broadcast %cst_94 : f32 to vector<8x288xf32>
    %148 = arith.maximumf %146, %147 : vector<8x288xf32>
    %c0_95 = arith.constant 0 : index
    %c1_96 = arith.constant 1 : index
    %c1_97 = arith.constant 1 : index
    %c0_98 = arith.constant 0 : index
    %c0_99 = arith.constant 0 : index
    %149 = vector.load %arg4[%c0_95, %c1_96, %c1_97, %c0_98, %c0_99] : memref<1x2x2x8x288xf32, #tpu.memory_space<vmem>>, vector<1x1x1x8x288xf32>
    %150 = vector.shape_cast %149 : vector<1x1x1x8x288xf32> to vector<8x288xf32>
    %151 = vector.shape_cast %148 : vector<8x288xf32> to vector<1x1x1x8x288xf32>
    tpu.vector_store %arg4[%c0_95, %c1_96, %c1_97, %c0_98, %c0_99], %151 {strides = array<i32>} : memref<1x2x2x8x288xf32, #tpu.memory_space<vmem>>, vector<1x1x1x8x288xf32>,
    return
  }
  func.func @transform_0(%arg0: i32, %arg1: i32) -> (i32, i32, i32) {
    %c0_i32 = arith.constant 0 : i32
    %c0_i32_0 = arith.constant 0 : i32
    %c0_i32_1 = arith.constant 0 : i32
    return %arg1, %c0_i32, %c0_i32_0 : i32, i32, i32
  }
  func.func @transform_1(%arg0: i32, %arg1: i32) -> (i32, i32, i32, i32) {
    %c0_i32 = arith.constant 0 : i32
    %c0_i32_0 = arith.constant 0 : i32
    %c0_i32_1 = arith.constant 0 : i32
    %c0_i32_2 = arith.constant 0 : i32
    return %c0_i32, %c0_i32_0, %arg0, %c0_i32_1 : i32, i32, i32, i32
  }
  func.func @transform_2(%arg0: i32, %arg1: i32) -> (i32, i32, i32, i32, i32) {
    %c0_i32 = arith.constant 0 : i32
    %c0_i32_0 = arith.constant 0 : i32
    %c0_i32_1 = arith.constant 0 : i32
    %c0_i32_2 = arith.constant 0 : i32
    return %arg1, %c0_i32, %c0_i32_0, %arg0, %c0_i32_1 : i32, i32, i32, i32, i32
  }
}

</mosaic_0001>

<llo_original>
// kernel: tpu_custom_call.1
$region0: #{tpu_custom_call.1}
  #allocation0 [shape = 'u32[]', space=smem, size = 0x4, offset = 0x4, fixed_abs, tag = 'smem constant byte address 0x4 - core index']
  #allocation1 [shape = 'u32[72,128]{1,0:T(1,128)}', space=vmem, size = 0x9000, scoped, tag = 'internal scratch']
  %s0 = inlined_call_operand.hbm [shape: f32[2,8,342], index: 0, kind: input, shape index: {}]
  %s1 = inlined_call_operand.hbm [shape: f32[2,2,8,32], index: 1, kind: input, shape index: {}]
  %s2 = inlined_call_operand.hbm [shape: f32[2,2,2,8,288], index: 2, kind: output, shape index: {}]
  %s3 = sld [smem:[#allocation0]]
  $region49: #{tpu_custom_call.1} parent=0
    _
  %s5 = ssub.s32 1, %s3
  %s6 = scalar_select 0, %s5, %s3
  $region1: #{tpu_custom_call.1} parent=0
    #allocation2 [shape = 'u8[24576]{0}', space=vmem, size = 0x6000, scoped, tag = 'input window, operand 0']
    #allocation3 [shape = 's32[2]{0}', space=sflag, size = 0x8, scoped, tag = 'scoped memory for tpu_custom_call.1']
    #allocation4 [shape = 's32[2]{0}', space=sflag, size = 0x8, scoped, tag = 'scoped memory for tpu_custom_call.1']
    #allocation5 [shape = 'u8[16384]{0}', space=vmem, size = 0x4000, scoped, tag = 'input window, operand 1, single buffered']
    #allocation6 [shape = 's32[1]{0}', space=sflag, size = 0x4, scoped, tag = 'scoped memory for tpu_custom_call.1']
    #allocation7 [shape = 'u8[98304]{0}', space=vmem, size = 0x18000, scoped, tag = 'output window, operand 0']
    %7 = vsyncpa [#allocation3], 0
    %s8 = scalar_lea.sflag [#allocation3], 1
    %9 = vsyncpa %s8, 0
    %10 = vsyncpa [#allocation6], 0
    %11 = vsyncpa [#allocation4], 0
    %s12 = scalar_lea.sflag [#allocation4], 1
    %13 = vsyncpa %s12, 0
    loop: start=0, step=1, limit=4
    $region2: #{tpu_custom_call.1} parent=1 // loop_pre_header
      _
    $region3: #{tpu_custom_call.1} parent=1 // loop_header
      %s15 = sphi 0, %s19
      %p16 = scmp.ge.s32.totalorder %s15, 4
      %s22 = sphi 0, %s34
      %s23 = sphi 0, %s30
      %s24 = sphi 0, %s22
      %s25 = sphi 0, %s23
      %s26 = sphi 0, %s24
      %s27 = sphi 0, %s25
      %s37 = sphi 0, %s39
      %s40 = sphi 0, %s37
      %s41 = sphi 0, %s40
      %s57 = sphi 0, %s41
      %s63 = sphi 0, %s65
      %s66 = sphi 0, %s63
      %s67 = sphi 0, %s66
      %s83 = sphi 0, %s67
      %s91 = sphi 0, %s93
      %s94 = sphi 0, %s91
      %s95 = sphi 0, %s94
      %s111 = sphi 0, %s95
    $region4: #{tpu_custom_call.1} parent=1 // loop_header_branch
      %18 = sbr.rel (%p16) target = $region8
    $region5: #{tpu_custom_call.1} parent=1 // loop_body
      %s20 = ssub.s32 %s15, 1
      %s21 = ssub.s32 %s15, 2
      %s28 = sadd.s32 1, %s23
      %p29 = scmp.ge.s32.totalorder %s28, 2
      %s30 = scalar_select %p29, 0, %s28
      %s31 = sadd.s32 1, %s22
      %s32 = scalar_select %p29, %s31, %s22
      %p33 = scmp.ge.s32.totalorder %s32, 1
      %s34 = scalar_select %p33, 0, %s32
      %s35 = ssub.s32 %s23, %s30
      %p36 = scmp.eq.s32.totalorder %s35, 0
      %s38 = sadd.s32 %s37, 1
      %s39 = scalar_select %p36, %s37, %s38
      %p42 = pneg %p36
      %p43 = scmp.eq.s32.totalorder %s15, 1
      %p44 = por %p42, %p43
      %p45 = scmp.ne.s32.totalorder %s37, %s40
      %p46 = scmp.eq.s32.totalorder %s15, 0
      %p47 = por %p45, %p46
      %p48 = scmp.ne.s32.totalorder %s37, %s40
      %p49 = scmp.eq.s32.totalorder %s20, 1
      %p50 = por %p48, %p49
      %p51 = scmp.ne.s32.totalorder %s40, %s41
      %p52 = scmp.eq.s32.totalorder %s20, 0
      %p53 = por %p51, %p52
      %p54 = scmp.ne.s32.totalorder %s40, %s41
      %p55 = scmp.eq.s32.totalorder %s21, 1
      %p56 = por %p54, %p55
      %p58 = scmp.ne.s32.totalorder %s41, %s57
      %p59 = scmp.eq.s32.totalorder %s21, 0
      %p60 = por %p58, %p59
      %s61 = ssub.s32 %s22, %s34
      %p62 = scmp.eq.s32.totalorder %s61, 0
      %s64 = sadd.s32 %s63, 1
      %s65 = scalar_select %p62, %s63, %s64
      %p68 = pneg %p62
      %p69 = scmp.eq.s32.totalorder %s15, 1
      %p70 = por %p68, %p69
      %p71 = scmp.ne.s32.totalorder %s63, %s66
      %p72 = scmp.eq.s32.totalorder %s15, 0
      %p73 = por %p71, %p72
      %p74 = scmp.ne.s32.totalorder %s63, %s66
      %p75 = scmp.eq.s32.totalorder %s20, 1
      %p76 = por %p74, %p75
      %p77 = scmp.ne.s32.totalorder %s66, %s67
      %p78 = scmp.eq.s32.totalorder %s20, 0
      %p79 = por %p77, %p78
      %p80 = scmp.ne.s32.totalorder %s66, %s67
      %p81 = scmp.eq.s32.totalorder %s21, 1
      %p82 = por %p80, %p81
      %p84 = scmp.ne.s32.totalorder %s67, %s83
      %p85 = scmp.eq.s32.totalorder %s21, 0
      %p86 = por %p84, %p85
      %s87 = ssub.s32 %s23, %s30
      %s88 = ssub.s32 %s22, %s34
      %s89 = sor.u32 %s87, %s88
      %p90 = scmp.eq.s32.totalorder %s89, 0
      %s92 = sadd.s32 %s91, 1
      %s93 = scalar_select %p90, %s91, %s92
      %p96 = pneg %p90
      %p97 = scmp.eq.s32.totalorder %s15, 1
      %p98 = por %p96, %p97
      %p99 = scmp.ne.s32.totalorder %s91, %s94
      %p100 = scmp.eq.s32.totalorder %s15, 0
      %p101 = por %p99, %p100
      %p102 = scmp.ne.s32.totalorder %s91, %s94
      %p103 = scmp.eq.s32.totalorder %s20, 1
      %p104 = por %p102, %p103
      %p105 = scmp.ne.s32.totalorder %s94, %s95
      %p106 = scmp.eq.s32.totalorder %s20, 0
      %p107 = por %p105, %p106
      %p108 = scmp.ne.s32.totalorder %s94, %s95
      %p109 = scmp.eq.s32.totalorder %s21, 1
      %p110 = por %p108, %p109
      %p112 = scmp.ne.s32.totalorder %s95, %s111
      %p113 = scmp.eq.s32.totalorder %s21, 0
      %p114 = por %p112, %p113
      %p115 = scmp.le.s32.totalorder 1, %s15
      %p116 = scmp.lt.s32.totalorder %s15, 3
      %p117 = pnand %p115, %p116
      %p118 = pneg %p117
      // Predicated region
      $region9: #{tpu_custom_call.1} parent=5 // pred_check
        _
      $region10: #{tpu_custom_call.1} parent=5 // pred_check_branch
        %120 = sbr.rel (%p117) target = $region12
      $region11: #{tpu_custom_call.1} parent=5 // pred_region
        %s121 = ssub.s32 %s15, 1
        // Predicated region
        $region13: #{tpu_custom_call.1} parent=11 // pred_check
          %p122 = pneg %p79
        $region14: #{tpu_custom_call.1} parent=11 // pred_check_branch
          %124 = sbr.rel (%p122) target = $region16
        $region15: #{tpu_custom_call.1} parent=11 // pred_region
          %126 = vsyncadd [#allocation6], 0
          %s127 = smul.addr %s24, 8
          %s128 = scalar_lea.hbm %s1, %s127
          %s129 = sshll.u32 %s128, 4
          %s130 = int_to_ptr.hbm [resolvable:$true] %s129
          %s131 = sshll.u32 [#allocation5], 4
          %s132 = int_to_ptr.vmem [resolvable:$true] %s131
          %137 = dma.hbm_to_vmem [thread:$0]  %s130, 512, %s132, [#allocation6], 128, 128, 8
        $region16: #{tpu_custom_call.1} parent=11 // pred_fallthru
          _
      $region12: #{tpu_custom_call.1} parent=5 // pred_fallthru
        _
      %p138 = scmp.lt.s32.totalorder %s15, 2
      // Predicated region
      $region17: #{tpu_custom_call.1} parent=5 // pred_check
        %p139 = pneg %p138
      $region18: #{tpu_custom_call.1} parent=5 // pred_check_branch
        %141 = sbr.rel (%p139) target = $region20
      $region19: #{tpu_custom_call.1} parent=5 // pred_region
        // Predicated region
        $region21: #{tpu_custom_call.1} parent=19 // pred_check
          %p142 = pneg %p47
        $region22: #{tpu_custom_call.1} parent=19 // pred_check_branch
          %144 = sbr.rel (%p142) target = $region24
        $region23: #{tpu_custom_call.1} parent=19 // pred_region
          %s145 = sand.u32 %s37, 1
          %s146 = scalar_lea.sflag [#allocation3], %s145
          %s147 = sand.u32 %s37, 1
          %s148 = smul.addr %s147, 24
          %s149 = scalar_lea.vmem [#allocation2], %s148
          %151 = vsyncadd %s146, 0
          %s152 = smul.addr %s23, 3
          %s153 = smul.addr %s152, 8
          %s154 = scalar_lea.hbm %s0, %s153
          %s156 = sshll.u32 %s154, 4
          %s157 = int_to_ptr.hbm [resolvable:$true] %s156
          %s158 = sshll.u32 %s149, 4
          %s159 = int_to_ptr.vmem [resolvable:$true] %s158
          %161 = dma.hbm_to_vmem [thread:$0]  %s157, 384, %s159, %s146
        $region24: #{tpu_custom_call.1} parent=19 // pred_fallthru
          _
      $region20: #{tpu_custom_call.1} parent=5 // pred_fallthru
        _
      %p162 = scmp.le.s32.totalorder 1, %s15
      %p163 = scmp.lt.s32.totalorder %s15, 3
      %p164 = pnand %p162, %p163
      %p165 = pneg %p164
      // Predicated region
      $region25: #{tpu_custom_call.1} parent=5 // pred_check
        _
      $region26: #{tpu_custom_call.1} parent=5 // pred_check_branch
        %167 = sbr.rel (%p164) target = $region28
      $region27: #{tpu_custom_call.1} parent=5 // pred_region
        %s168 = ssub.s32 %s15, 1
        %s169 = sand.u32 %s40, 1
        %s170 = scalar_lea.sflag [#allocation3], %s169
        %s171 = sand.u32 %s40, 1
        %s172 = smul.addr %s171, 24
        %s173 = scalar_lea.vmem [#allocation2], %s172
        // Predicated region
        $region29: #{tpu_custom_call.1} parent=27 // pred_check
          %p174 = pneg %p53
        $region30: #{tpu_custom_call.1} parent=27 // pred_check_branch
          %176 = sbr.rel (%p174) target = $region32
        $region31: #{tpu_custom_call.1} parent=27 // pred_region
          %178 = dma.done %s170, 384
        $region32: #{tpu_custom_call.1} parent=27 // pred_fallthru
          _
        // Predicated region
        $region33: #{tpu_custom_call.1} parent=27 // pred_check
          %p179 = pneg %p79
        $region34: #{tpu_custom_call.1} parent=27 // pred_check_branch
          %181 = sbr.rel (%p179) target = $region36
        $region35: #{tpu_custom_call.1} parent=27 // pred_region
          %183 = dma.done [#allocation6], 512
        $region36: #{tpu_custom_call.1} parent=27 // pred_fallthru
          _
        %s184 = sand.u32 %s40, 1
        %s185 = scalar_lea.sflag [#allocation3], %s184
        %s186 = sand.u32 %s40, 1
        %s187 = smul.addr %s186, 24
        %s188 = scalar_lea.vmem [#allocation2], %s187
        %p189 = pneg %p53
        %p190 = pneg %p50
        %p191 = pneg %p79
        %p192 = pneg %p76
        %p193 = pneg %p107
        %p194 = pneg %p104
        %s195 = sand.u32 %s94, 1
        %s196 = scalar_lea.sflag [#allocation4], %s195
        %s197 = sand.u32 %s94, 1
        %s198 = smul.addr %s197, 96
        %s199 = scalar_lea.vmem [#allocation7], %s198
        %v200 = vld [vmem:[%s173] sm:$0xff]
        %v201 = vld [vmem:[%s173 + $0x8] sm:$0xff]
        %v202 = vld [vmem:[%s173 + $0x10] sm:$0xff]
        %v203 = vlaneseq
        %v204 = vand.u32 %v203, 127
        %v205 = vadd.s32 %v204, 128
        %v206 = vadd.s32 %v204, 256
        %vm207 = vcmp.lt.s32.totalorder %v204, 0
        %v208 = vsub.s32 0, %v204
        %v209 = vsel %vm207, %v208, %v204
        %v210 = vand.u32 %v209, 65535
        %v211 = vshrl.u32 %v209, 16
        %v213 = vmul.u32 %v210, 14564
        %v214 = vmul.u32 %v210, 58254
        %v215 = vmul.u32 %v211, 14564
        %v216 = vmul.u32 %v211, 58254
        %v217 = vshll.u32 %v214, 16
        %v218 = vshrl.u32 %v214, 16
        %v219 = vshll.u32 %v215, 16
        %v220 = vshrl.u32 %v215, 16
        %vm221 = vc.u32 %v213, %v217
        %v222 = vsel %vm221, 1, 0
        %v223 = vadd.s32 %v213, %v217
        %v224 = vadd.s32 %v216, %v222
        %vm225 = vc.u32 %v223, %v219
        %v226 = vsel %vm225, 1, 0
        %v227 = vadd.s32 %v223, %v219
        %v228 = vadd.s32 %v224, %v226
        %v229 = vadd.s32 %v228, %v218
        %v230 = vadd.s32 %v229, %v220
        %v231 = vshrl.u32 %v230, 4
        %v232 = vmul.u32 %v231, 18
        %v233 = vsub.s32 %v209, %v232
        %v234 = vsub.s32 0, %v233
        %v235 = vsel %vm207, %v234, %v233
        %vm236 = vcmp.lt.s32.totalorder %v205, 0
        %v237 = vsub.s32 0, %v205
        %v238 = vsel %vm236, %v237, %v205
        %v239 = vand.u32 %v238, 65535
        %v240 = vshrl.u32 %v238, 16
        %v242 = vmul.u32 %v239, 14564
        %v243 = vmul.u32 %v239, 58254
        %v244 = vmul.u32 %v240, 14564
        %v245 = vmul.u32 %v240, 58254
        %v246 = vshll.u32 %v243, 16
        %v247 = vshrl.u32 %v243, 16
        %v248 = vshll.u32 %v244, 16
        %v249 = vshrl.u32 %v244, 16
        %vm250 = vc.u32 %v242, %v246
        %v251 = vsel %vm250, 1, 0
        %v252 = vadd.s32 %v242, %v246
        %v253 = vadd.s32 %v245, %v251
        %vm254 = vc.u32 %v252, %v248
        %v255 = vsel %vm254, 1, 0
        %v256 = vadd.s32 %v252, %v248
        %v257 = vadd.s32 %v253, %v255
        %v258 = vadd.s32 %v257, %v247
        %v259 = vadd.s32 %v258, %v249
        %v260 = vshrl.u32 %v259, 4
        %v261 = vmul.u32 %v260, 18
        %v262 = vsub.s32 %v238, %v261
        %v263 = vsub.s32 0, %v262
        %v264 = vsel %vm236, %v263, %v262
        %vm265 = vcmp.lt.s32.totalorder %v206, 0
        %v266 = vsub.s32 0, %v206
        %v267 = vsel %vm265, %v266, %v206
        %v268 = vand.u32 %v267, 65535
        %v269 = vshrl.u32 %v267, 16
        %v271 = vmul.u32 %v268, 14564
        %v272 = vmul.u32 %v268, 58254
        %v273 = vmul.u32 %v269, 14564
        %v274 = vmul.u32 %v269, 58254
        %v275 = vshll.u32 %v272, 16
        %v276 = vshrl.u32 %v272, 16
        %v277 = vshll.u32 %v273, 16
        %v278 = vshrl.u32 %v273, 16
        %vm279 = vc.u32 %v271, %v275
        %v280 = vsel %vm279, 1, 0
        %v281 = vadd.s32 %v271, %v275
        %v282 = vadd.s32 %v274, %v280
        %vm283 = vc.u32 %v281, %v277
        %v284 = vsel %vm283, 1, 0
        %v285 = vadd.s32 %v281, %v277
        %v286 = vadd.s32 %v282, %v284
        %v287 = vadd.s32 %v286, %v276
        %v288 = vadd.s32 %v287, %v278
        %v289 = vshrl.u32 %v288, 4
        %v290 = vmul.u32 %v289, 18
        %v291 = vsub.s32 %v267, %v290
        %v292 = vsub.s32 0, %v291
        %v293 = vsel %vm265, %v292, %v291
        %vm294 = vcmp.ne.s32.totalorder %v235, 0
        %vm295 = vcmp.ne.s32.totalorder %v264, 0
        %vm296 = vcmp.ne.s32.totalorder %v293, 0
        %vm297 = vcmp.lt.s32.totalorder %v235, 0
        %vm298 = vcmp.lt.s32.totalorder %v264, 0
        %vm299 = vcmp.lt.s32.totalorder %v293, 0
        %vm300 = vmand %vm297, %vm294
        %vm301 = vmand %vm298, %vm295
        %vm302 = vmand %vm299, %vm296
        %v303 = vadd.s32 %v235, 18
        %v304 = vadd.s32 %v264, 18
        %v305 = vadd.s32 %v293, 18
        %v306 = vsel %vm300, %v303, %v235
        %v307 = vsel %vm301, %v304, %v264
        %v308 = vsel %vm302, %v305, %v293
        %vm309 = vcmp.lt.s32.totalorder %v306, 16
        %vm310 = vcmp.lt.s32.totalorder %v307, 16
        %vm311 = vcmp.lt.s32.totalorder %v308, 16
        %v312 = vsel %vm309, 1, 0
        %v313 = vsel %vm310, 1, 0
        %v314 = vsel %vm311, 1, 0
        %v315 = vcvt.s32.f32 %v312
        %v316 = vcvt.s32.f32 %v313
        %v317 = vcvt.s32.f32 %v314
        %321 = vrot.lane.b32.xlu0 %v200, 127
        %v322 = vpop.permute.xlu0 %321
        %323 = vrot.lane.b32.xlu0 %v201, 127
        %v324 = vpop.permute.xlu0 %323
        %325 = vrot.lane.b32.xlu0 %v202, 127
        %v326 = vpop.permute.xlu0 %325
        %vm327 = vcmask 1039360
        %v328 = vsel %vm327, %v322, %v324
        %v329 = vsel %vm327, %v324, %v326
        %333 = vrot.lane.b32.xlu0 %v200, 110
        %v334 = vpop.permute.xlu0 %333
        %335 = vrot.lane.b32.xlu0 %v201, 110
        %v336 = vpop.permute.xlu0 %335
        %337 = vrot.lane.b32.xlu0 %v202, 110
        %v338 = vpop.permute.xlu0 %337
        %vm339 = vcmask 900096
        %v340 = vsel %vm339, %v334, %v336
        %v341 = vsel %vm339, %v336, %v338
        %345 = vrot.lane.b32.xlu0 %v200, 109
        %v346 = vpop.permute.xlu0 %345
        %347 = vrot.lane.b32.xlu0 %v201, 109
        %v348 = vpop.permute.xlu0 %347
        %349 = vrot.lane.b32.xlu0 %v202, 109
        %v350 = vpop.permute.xlu0 %349
        %vm351 = vcmask 891904
        %v352 = vsel %vm351, %v346, %v348
        %v353 = vsel %vm351, %v348, %v350
        %v357 = vld [vmem:[#allocation5] sm:$0xff]
        %vm358 = vcmask 261120
        %v360 = vsel %vm358, %v357, 0
        %362 = vmatpush.msra.mxu0 0.0
        %363 = vmatpush.msra.mxu0 0.0
        %364 = vmatpush.msra.mxu0 0.0
        %365 = vmatpush.msra.mxu0 0.0
        %366 = vmatpush.msra.mxu0 0.0
        %367 = vmatpush.msra.mxu0 0.0
        %368 = vmatpush.msra.mxu0 0.0
        %369 = vmatpush.msra.mxu0 0.0
        %370 = vmatpush.msra.mxu0 0.0
        %371 = vmatpush.msra.mxu0 0.0
        %372 = vmatpush.msra.mxu0 0.0
        %373 = vmatpush.msra.mxu0 0.0
        %374 = vmatpush.msra.mxu0 %v352
        %375 = vmatpush.msra.mxu0 %v340
        %376 = vmatpush.msra.mxu0 %v328
        %377 = vmatpush.msra.mxu0 %v200
        %378 = vmatmul.f32.gmra.mxu0 %v360
        %v379 = vpop.f32.mrf.mxu0
        %v380 = vadd.f32 0.0, %v379
        %381 = vdwg.mxu0
        %382 = vmatpush.msra.mxu0 0.0
        %383 = vmatpush.msra.mxu0 0.0
        %384 = vmatpush.msra.mxu0 0.0
        %385 = vmatpush.msra.mxu0 0.0
        %386 = vmatpush.msra.mxu0 0.0
        %387 = vmatpush.msra.mxu0 0.0
        %388 = vmatpush.msra.mxu0 0.0
        %389 = vmatpush.msra.mxu0 0.0
        %390 = vmatpush.msra.mxu0 0.0
        %391 = vmatpush.msra.mxu0 0.0
        %392 = vmatpush.msra.mxu0 0.0
        %393 = vmatpush.msra.mxu0 0.0
        %394 = vmatpush.msra.mxu0 %v353
        %395 = vmatpush.msra.mxu0 %v341
        %396 = vmatpush.msra.mxu0 %v329
        %397 = vmatpush.msra.mxu0 %v201
        %398 = vmatmul.f32.gmra.mxu0 %v360
        %v399 = vpop.f32.mrf.mxu0
        %v400 = vadd.f32 0.0, %v399
        %401 = vdwg.mxu0
        %402 = vmatpush.msra.mxu0 0.0
        %403 = vmatpush.msra.mxu0 0.0
        %404 = vmatpush.msra.mxu0 0.0
        %405 = vmatpush.msra.mxu0 0.0
        %406 = vmatpush.msra.mxu0 0.0
        %407 = vmatpush.msra.mxu0 0.0
        %408 = vmatpush.msra.mxu0 0.0
        %409 = vmatpush.msra.mxu0 0.0
        %410 = vmatpush.msra.mxu0 0.0
        %411 = vmatpush.msra.mxu0 0.0
        %412 = vmatpush.msra.mxu0 0.0
        %413 = vmatpush.msra.mxu0 0.0
        %414 = vmatpush.msra.mxu0 %v350
        %415 = vmatpush.msra.mxu0 %v338
        %416 = vmatpush.msra.mxu0 %v326
        %417 = vmatpush.msra.mxu0 %v202
        %418 = vmatmul.f32.gmra.mxu0 %v360
        %v419 = vpop.f32.mrf.mxu0
        %v420 = vadd.f32 0.0, %v419
        %421 = vdwg.mxu0
        %v422 = vmul.f32 %v380, %v315
        %v423 = vmul.f32 %v400, %v316
        %v424 = vmul.f32 %v420, %v317
        %v425 = vadd.f32 %v422, %v423
        %v426 = vsel %vm358, %v424, 0.0
        %v427 = vadd.f32 %v425, %v426
        %428 = vadd.xlane.f32.xlu0 %v427
        %v429 = vpop.xlane.xlu0 %428
        %v430 = vadd.f32 %v429, 0.0
        %v431 = vmul.f32 %v422, %v380
        %v432 = vmul.f32 %v423, %v400
        %v433 = vmul.f32 %v424, %v420
        %v434 = vadd.f32 %v431, %v432
        %v435 = vsel %vm358, %v433, 0.0
        %v436 = vadd.f32 %v434, %v435
        %437 = vadd.xlane.f32.xlu0 %v436
        %v438 = vpop.xlane.xlu0 %437
        %v439 = vadd.f32 %v438, 0.0
        %440 = vst [vmem:[%s199] sm:$0xff] %v380
        %441 = vst [vmem:[%s199 + $0x8] sm:$0xff] %v400
        %442 = vst.msk [vmem:[%s199 + $0x10] sm:$0xff] %vm358, %v420
        %s443 = scalar_lea.vmem [#allocation5], 8
        %v444 = vld [vmem:[%s443] sm:$0xff]
        %445 = vrot.lane.b32.xlu0 %v328, 127
        %v446 = vpop.permute.xlu0 %445
        %447 = vrot.lane.b32.xlu0 %v329, 127
        %v448 = vpop.permute.xlu0 %447
        %449 = vrot.lane.b32.xlu0 %v326, 127
        %v450 = vpop.permute.xlu0 %449
        %451 = vrot.lane.b32.xlu0 %v340, 127
        %v452 = vpop.permute.xlu0 %451
        %453 = vrot.lane.b32.xlu0 %v341, 127
        %v454 = vpop.permute.xlu0 %453
        %455 = vrot.lane.b32.xlu0 %v338, 127
        %v456 = vpop.permute.xlu0 %455
        %457 = vrot.lane.b32.xlu0 %v352, 127
        %v458 = vpop.permute.xlu0 %457
        %459 = vrot.lane.b32.xlu0 %v353, 127
        %v460 = vpop.permute.xlu0 %459
        %461 = vrot.lane.b32.xlu0 %v350, 127
        %v462 = vpop.permute.xlu0 %461
        %v463 = vsel %vm327, %v446, %v448
        %v464 = vsel %vm327, %v448, %v450
        %v465 = vsel %vm327, %v452, %v454
        %v466 = vsel %vm327, %v454, %v456
        %v467 = vsel %vm327, %v458, %v460
        %v468 = vsel %vm327, %v460, %v462
        %v479 = vsel %vm358, %v444, 0
        %481 = vmatpush.msra.mxu0 0.0
        %482 = vmatpush.msra.mxu0 0.0
        %483 = vmatpush.msra.mxu0 0.0
        %484 = vmatpush.msra.mxu0 0.0
        %485 = vmatpush.msra.mxu0 0.0
        %486 = vmatpush.msra.mxu0 0.0
        %487 = vmatpush.msra.mxu0 0.0
        %488 = vmatpush.msra.mxu0 0.0
        %489 = vmatpush.msra.mxu0 0.0
        %490 = vmatpush.msra.mxu0 0.0
        %491 = vmatpush.msra.mxu0 0.0
        %492 = vmatpush.msra.mxu0 0.0
        %493 = vmatpush.msra.mxu0 %v467
        %494 = vmatpush.msra.mxu0 %v465
        %495 = vmatpush.msra.mxu0 %v463
        %496 = vmatpush.msra.mxu0 %v328
        %497 = vmatmul.f32.gmra.mxu0 %v479
        %v498 = vpop.f32.mrf.mxu0
        %v499 = vadd.f32 0.0, %v498
        %500 = vdwg.mxu0
        %501 = vmatpush.msra.mxu0 0.0
        %502 = vmatpush.msra.mxu0 0.0
        %503 = vmatpush.msra.mxu0 0.0
        %504 = vmatpush.msra.mxu0 0.0
        %505 = vmatpush.msra.mxu0 0.0
        %506 = vmatpush.msra.mxu0 0.0
        %507 = vmatpush.msra.mxu0 0.0
        %508 = vmatpush.msra.mxu0 0.0
        %509 = vmatpush.msra.mxu0 0.0
        %510 = vmatpush.msra.mxu0 0.0
        %511 = vmatpush.msra.mxu0 0.0
        %512 = vmatpush.msra.mxu0 0.0
        %513 = vmatpush.msra.mxu0 %v468
        %514 = vmatpush.msra.mxu0 %v466
        %515 = vmatpush.msra.mxu0 %v464
        %516 = vmatpush.msra.mxu0 %v329
        %517 = vmatmul.f32.gmra.mxu0 %v479
        %v518 = vpop.f32.mrf.mxu0
        %v519 = vadd.f32 0.0, %v518
        %520 = vdwg.mxu0
        %521 = vmatpush.msra.mxu0 0.0
        %522 = vmatpush.msra.mxu0 0.0
        %523 = vmatpush.msra.mxu0 0.0
        %524 = vmatpush.msra.mxu0 0.0
        %525 = vmatpush.msra.mxu0 0.0
        %526 = vmatpush.msra.mxu0 0.0
        %527 = vmatpush.msra.mxu0 0.0
        %528 = vmatpush.msra.mxu0 0.0
        %529 = vmatpush.msra.mxu0 0.0
        %530 = vmatpush.msra.mxu0 0.0
        %531 = vmatpush.msra.mxu0 0.0
        %532 = vmatpush.msra.mxu0 0.0
        %533 = vmatpush.msra.mxu0 %v462
        %534 = vmatpush.msra.mxu0 %v456
        %535 = vmatpush.msra.mxu0 %v450
        %536 = vmatpush.msra.mxu0 %v326
        %537 = vmatmul.f32.gmra.mxu0 %v479
        %v538 = vpop.f32.mrf.mxu0
        %v539 = vadd.f32 0.0, %v538
        %540 = vdwg.mxu0
        %v541 = vmul.f32 %v499, %v315
        %v542 = vmul.f32 %v519, %v316
        %v543 = vmul.f32 %v539, %v317
        %v544 = vadd.f32 %v541, %v542
        %v545 = vsel %vm358, %v543, 0.0
        %v546 = vadd.f32 %v544, %v545
        %547 = vadd.xlane.f32.xlu0 %v546
        %v548 = vpop.xlane.xlu0 %547
        %v549 = vadd.f32 %v430, %v548
        %v550 = vmul.f32 %v541, %v499
        %v551 = vmul.f32 %v542, %v519
        %v552 = vmul.f32 %v543, %v539
        %v553 = vadd.f32 %v550, %v551
        %v554 = vsel %vm358, %v552, 0.0
        %v555 = vadd.f32 %v553, %v554
        %556 = vadd.xlane.f32.xlu0 %v555
        %v557 = vpop.xlane.xlu0 %556
        %v558 = vadd.f32 %v439, %v557
        %s559 = scalar_lea.vmem %s199, 24 [#allocation7]
        %560 = vst [vmem:[%s559] sm:$0xff] %v499
        %561 = vst [vmem:[%s559 + $0x8] sm:$0xff] %v519
        %562 = vst.msk [vmem:[%s559 + $0x10] sm:$0xff] %vm358, %v539
        %s563 = scalar_lea.vmem [#allocation5], 16
        %v564 = vld [vmem:[%s563] sm:$0xff]
        %565 = vrot.lane.b32.xlu0 %v328, 110
        %v566 = vpop.permute.xlu0 %565
        %567 = vrot.lane.b32.xlu0 %v329, 110
        %v568 = vpop.permute.xlu0 %567
        %569 = vrot.lane.b32.xlu0 %v326, 110
        %v570 = vpop.permute.xlu0 %569
        %571 = vrot.lane.b32.xlu0 %v340, 110
        %v572 = vpop.permute.xlu0 %571
        %573 = vrot.lane.b32.xlu0 %v341, 110
        %v574 = vpop.permute.xlu0 %573
        %575 = vrot.lane.b32.xlu0 %v338, 110
        %v576 = vpop.permute.xlu0 %575
        %577 = vrot.lane.b32.xlu0 %v352, 110
        %v578 = vpop.permute.xlu0 %577
        %579 = vrot.lane.b32.xlu0 %v353, 110
        %v580 = vpop.permute.xlu0 %579
        %581 = vrot.lane.b32.xlu0 %v350, 110
        %v582 = vpop.permute.xlu0 %581
        %v583 = vsel %vm339, %v566, %v568
        %v584 = vsel %vm339, %v568, %v570
        %v585 = vsel %vm339, %v572, %v574
        %v586 = vsel %vm339, %v574, %v576
        %v587 = vsel %vm339, %v578, %v580
        %v588 = vsel %vm339, %v580, %v582
        %v599 = vsel %vm358, %v564, 0
        %601 = vmatpush.msra.mxu0 0.0
        %602 = vmatpush.msra.mxu0 0.0
        %603 = vmatpush.msra.mxu0 0.0
        %604 = vmatpush.msra.mxu0 0.0
        %605 = vmatpush.msra.mxu0 0.0
        %606 = vmatpush.msra.mxu0 0.0
        %607 = vmatpush.msra.mxu0 0.0
        %608 = vmatpush.msra.mxu0 0.0
        %609 = vmatpush.msra.mxu0 0.0
        %610 = vmatpush.msra.mxu0 0.0
        %611 = vmatpush.msra.mxu0 0.0
        %612 = vmatpush.msra.mxu0 0.0
        %613 = vmatpush.msra.mxu0 %v587
        %614 = vmatpush.msra.mxu0 %v585
        %615 = vmatpush.msra.mxu0 %v583
        %616 = vmatpush.msra.mxu0 %v340
        %617 = vmatmul.f32.gmra.mxu0 %v599
        %v618 = vpop.f32.mrf.mxu0
        %v619 = vadd.f32 0.0, %v618
        %620 = vdwg.mxu0
        %621 = vmatpush.msra.mxu0 0.0
        %622 = vmatpush.msra.mxu0 0.0
        %623 = vmatpush.msra.mxu0 0.0
        %624 = vmatpush.msra.mxu0 0.0
        %625 = vmatpush.msra.mxu0 0.0
        %626 = vmatpush.msra.mxu0 0.0
        %627 = vmatpush.msra.mxu0 0.0
        %628 = vmatpush.msra.mxu0 0.0
        %629 = vmatpush.msra.mxu0 0.0
        %630 = vmatpush.msra.mxu0 0.0
        %631 = vmatpush.msra.mxu0 0.0
        %632 = vmatpush.msra.mxu0 0.0
        %633 = vmatpush.msra.mxu0 %v588
        %634 = vmatpush.msra.mxu0 %v586
        %635 = vmatpush.msra.mxu0 %v584
        %636 = vmatpush.msra.mxu0 %v341
        %637 = vmatmul.f32.gmra.mxu0 %v599
        %v638 = vpop.f32.mrf.mxu0
        %v639 = vadd.f32 0.0, %v638
        %640 = vdwg.mxu0
        %641 = vmatpush.msra.mxu0 0.0
        %642 = vmatpush.msra.mxu0 0.0
        %643 = vmatpush.msra.mxu0 0.0
        %644 = vmatpush.msra.mxu0 0.0
        %645 = vmatpush.msra.mxu0 0.0
        %646 = vmatpush.msra.mxu0 0.0
        %647 = vmatpush.msra.mxu0 0.0
        %648 = vmatpush.msra.mxu0 0.0
        %649 = vmatpush.msra.mxu0 0.0
        %650 = vmatpush.msra.mxu0 0.0
        %651 = vmatpush.msra.mxu0 0.0
        %652 = vmatpush.msra.mxu0 0.0
        %653 = vmatpush.msra.mxu0 %v582
        %654 = vmatpush.msra.mxu0 %v576
        %655 = vmatpush.msra.mxu0 %v570
        %656 = vmatpush.msra.mxu0 %v338
        %657 = vmatmul.f32.gmra.mxu0 %v599
        %v658 = vpop.f32.mrf.mxu0
        %v659 = vadd.f32 0.0, %v658
        %660 = vdwg.mxu0
        %v661 = vmul.f32 %v619, %v315
        %v662 = vmul.f32 %v639, %v316
        %v663 = vmul.f32 %v659, %v317
        %v664 = vadd.f32 %v661, %v662
        %v665 = vsel %vm358, %v663, 0.0
        %v666 = vadd.f32 %v664, %v665
        %667 = vadd.xlane.f32.xlu0 %v666
        %v668 = vpop.xlane.xlu0 %667
        %v669 = vadd.f32 %v549, %v668
        %v670 = vmul.f32 %v661, %v619
        %v671 = vmul.f32 %v662, %v639
        %v672 = vmul.f32 %v663, %v659
        %v673 = vadd.f32 %v670, %v671
        %v674 = vsel %vm358, %v672, 0.0
        %v675 = vadd.f32 %v673, %v674
        %676 = vadd.xlane.f32.xlu0 %v675
        %v677 = vpop.xlane.xlu0 %676
        %v678 = vadd.f32 %v558, %v677
        %s679 = scalar_lea.vmem %s199, 48 [#allocation7]
        %680 = vst [vmem:[%s679] sm:$0xff] %v619
        %681 = vst [vmem:[%s679 + $0x8] sm:$0xff] %v639
        %682 = vst.msk [vmem:[%s679 + $0x10] sm:$0xff] %vm358, %v659
        %s683 = scalar_lea.vmem [#allocation5], 24
        %v684 = vld [vmem:[%s683] sm:$0xff]
        %685 = vrot.lane.b32.xlu0 %v328, 109
        %v686 = vpop.permute.xlu0 %685
        %687 = vrot.lane.b32.xlu0 %v329, 109
        %v688 = vpop.permute.xlu0 %687
        %689 = vrot.lane.b32.xlu0 %v326, 109
        %v690 = vpop.permute.xlu0 %689
        %691 = vrot.lane.b32.xlu0 %v340, 109
        %v692 = vpop.permute.xlu0 %691
        %693 = vrot.lane.b32.xlu0 %v341, 109
        %v694 = vpop.permute.xlu0 %693
        %695 = vrot.lane.b32.xlu0 %v338, 109
        %v696 = vpop.permute.xlu0 %695
        %697 = vrot.lane.b32.xlu0 %v352, 109
        %v698 = vpop.permute.xlu0 %697
        %699 = vrot.lane.b32.xlu0 %v353, 109
        %v700 = vpop.permute.xlu0 %699
        %701 = vrot.lane.b32.xlu0 %v350, 109
        %v702 = vpop.permute.xlu0 %701
        %v703 = vsel %vm351, %v686, %v688
        %v704 = vsel %vm351, %v688, %v690
        %v705 = vsel %vm351, %v692, %v694
        %v706 = vsel %vm351, %v694, %v696
        %v707 = vsel %vm351, %v698, %v700
        %v708 = vsel %vm351, %v700, %v702
        %v719 = vsel %vm358, %v684, 0
        %721 = vmatpush.msra.mxu0 0.0
        %722 = vmatpush.msra.mxu0 0.0
        %723 = vmatpush.msra.mxu0 0.0
        %724 = vmatpush.msra.mxu0 0.0
        %725 = vmatpush.msra.mxu0 0.0
        %726 = vmatpush.msra.mxu0 0.0
        %727 = vmatpush.msra.mxu0 0.0
        %728 = vmatpush.msra.mxu0 0.0
        %729 = vmatpush.msra.mxu0 0.0
        %730 = vmatpush.msra.mxu0 0.0
        %731 = vmatpush.msra.mxu0 0.0
        %732 = vmatpush.msra.mxu0 0.0
        %733 = vmatpush.msra.mxu0 %v707
        %734 = vmatpush.msra.mxu0 %v705
        %735 = vmatpush.msra.mxu0 %v703
        %736 = vmatpush.msra.mxu0 %v352
        %737 = vmatmul.f32.gmra.mxu0 %v719
        %v738 = vpop.f32.mrf.mxu0
        %v739 = vadd.f32 0.0, %v738
        %740 = vdwg.mxu0
        %741 = vmatpush.msra.mxu0 0.0
        %742 = vmatpush.msra.mxu0 0.0
        %743 = vmatpush.msra.mxu0 0.0
        %744 = vmatpush.msra.mxu0 0.0
        %745 = vmatpush.msra.mxu0 0.0
        %746 = vmatpush.msra.mxu0 0.0
        %747 = vmatpush.msra.mxu0 0.0
        %748 = vmatpush.msra.mxu0 0.0
        %749 = vmatpush.msra.mxu0 0.0
        %750 = vmatpush.msra.mxu0 0.0
        %751 = vmatpush.msra.mxu0 0.0
        %752 = vmatpush.msra.mxu0 0.0
        %753 = vmatpush.msra.mxu0 %v708
        %754 = vmatpush.msra.mxu0 %v706
        %755 = vmatpush.msra.mxu0 %v704
        %756 = vmatpush.msra.mxu0 %v353
        %757 = vmatmul.f32.gmra.mxu0 %v719
        %v758 = vpop.f32.mrf.mxu0
        %v759 = vadd.f32 0.0, %v758
        %760 = vdwg.mxu0
        %761 = vmatpush.msra.mxu0 0.0
        %762 = vmatpush.msra.mxu0 0.0
        %763 = vmatpush.msra.mxu0 0.0
        %764 = vmatpush.msra.mxu0 0.0
        %765 = vmatpush.msra.mxu0 0.0
        %766 = vmatpush.msra.mxu0 0.0
        %767 = vmatpush.msra.mxu0 0.0
        %768 = vmatpush.msra.mxu0 0.0
        %769 = vmatpush.msra.mxu0 0.0
        %770 = vmatpush.msra.mxu0 0.0
        %771 = vmatpush.msra.mxu0 0.0
        %772 = vmatpush.msra.mxu0 0.0
        %773 = vmatpush.msra.mxu0 %v702
        %774 = vmatpush.msra.mxu0 %v696
        %775 = vmatpush.msra.mxu0 %v690
        %776 = vmatpush.msra.mxu0 %v350
        %777 = vmatmul.f32.gmra.mxu0 %v719
        %v778 = vpop.f32.mrf.mxu0
        %v779 = vadd.f32 0.0, %v778
        %780 = vdwg.mxu0
        %v781 = vmul.f32 %v739, %v315
        %v782 = vmul.f32 %v759, %v316
        %v783 = vmul.f32 %v779, %v317
        %v784 = vadd.f32 %v781, %v782
        %v785 = vsel %vm358, %v783, 0.0
        %v786 = vadd.f32 %v784, %v785
        %787 = vadd.xlane.f32.xlu0 %v786
        %v788 = vpop.xlane.xlu0 %787
        %v789 = vadd.f32 %v669, %v788
        %v790 = vmul.f32 %v781, %v739
        %v791 = vmul.f32 %v782, %v759
        %v792 = vmul.f32 %v783, %v779
        %v793 = vadd.f32 %v790, %v791
        %v794 = vsel %vm358, %v792, 0.0
        %v795 = vadd.f32 %v793, %v794
        %796 = vadd.xlane.f32.xlu0 %v795
        %v797 = vpop.xlane.xlu0 %796
        %v798 = vadd.f32 %v678, %v797
        %s799 = scalar_lea.vmem %s199, 72 [#allocation7]
        %800 = vst [vmem:[%s799] sm:$0xff] %v739
        %801 = vst [vmem:[%s799 + $0x8] sm:$0xff] %v759
        %802 = vst.msk [vmem:[%s799 + $0x10] sm:$0xff] %vm358, %v779
        %v803 = vmul.f32 %v789, 0.0009765625
        %v804 = vmul.f32 %v798, 0.0009765625
        %v805 = vmul.f32 %v803, %v803
        %v806 = vsub.f32 %v804, %v805
        %v807 = vadd.f32 %v806, 1e-05
        %v808 = vrsqrt.pop %v807
        %v809 = vmul.f32 %v808, %v807
        %v810 = vmul.f32 %v809, %v808
        %v811 = vmul.f32 0.5, %v810
        %v812 = vsub.f32 1.5, %v811
        %v813 = vmul.f32 %v808, %v812
        %vm814 = vweird.f32 %v807
        %vm815 = vweird.f32 %v808
        %vm816 = vmor %vm814, %vm815
        %v817 = vsel %vm816, %v808, %v813
        %v818 = vmul.f32 %v803, %v817
        %v819 = vld [vmem:[%s199] sm:$0xff]
        %v820 = vld [vmem:[%s199 + $0x8] sm:$0xff]
        %v821 = vld [vmem:[%s199 + $0x10] sm:$0xff]
        %v822 = vmul.f32 %v819, %v817
        %v823 = vmul.f32 %v820, %v817
        %v824 = vmul.f32 %v821, %v817
        %v825 = vsub.f32 %v822, %v818
        %v826 = vsub.f32 %v823, %v818
        %v827 = vsub.f32 %v824, %v818
        %v828 = vmax.f32 %v825, 0.0
        %v829 = vmax.f32 %v826, 0.0
        %v830 = vmax.f32 %v827, 0.0
        %831 = vst [vmem:[%s199] sm:$0xff] %v828
        %832 = vst [vmem:[%s199 + $0x8] sm:$0xff] %v829
        %833 = vst.msk [vmem:[%s199 + $0x10] sm:$0xff] %vm358, %v830
        %v834 = vld [vmem:[%s559] sm:$0xff]
        %v835 = vld [vmem:[%s559 + $0x8] sm:$0xff]
        %v836 = vld [vmem:[%s559 + $0x10] sm:$0xff]
        %v837 = vmul.f32 %v834, %v817
        %v838 = vmul.f32 %v835, %v817
        %v839 = vmul.f32 %v836, %v817
        %v840 = vsub.f32 %v837, %v818
        %v841 = vsub.f32 %v838, %v818
        %v842 = vsub.f32 %v839, %v818
        %v843 = vmax.f32 %v840, 0.0
        %v844 = vmax.f32 %v841, 0.0
        %v845 = vmax.f32 %v842, 0.0
        %846 = vst [vmem:[%s559] sm:$0xff] %v843
        %847 = vst [vmem:[%s559 + $0x8] sm:$0xff] %v844
        %848 = vst.msk [vmem:[%s559 + $0x10] sm:$0xff] %vm358, %v845
        %v849 = vld [vmem:[%s679] sm:$0xff]
        %v850 = vld [vmem:[%s679 + $0x8] sm:$0xff]
        %v851 = vld [vmem:[%s679 + $0x10] sm:$0xff]
        %v852 = vmul.f32 %v849, %v817
        %v853 = vmul.f32 %v850, %v817
        %v854 = vmul.f32 %v851, %v817
        %v855 = vsub.f32 %v852, %v818
        %v856 = vsub.f32 %v853, %v818
        %v857 = vsub.f32 %v854, %v818
        %v858 = vmax.f32 %v855, 0.0
        %v859 = vmax.f32 %v856, 0.0
        %v860 = vmax.f32 %v857, 0.0
        %861 = vst [vmem:[%s679] sm:$0xff] %v858
        %862 = vst [vmem:[%s679 + $0x8] sm:$0xff] %v859
        %863 = vst.msk [vmem:[%s679 + $0x10] sm:$0xff] %vm358, %v860
        %v864 = vld [vmem:[%s799] sm:$0xff]
        %v865 = vld [vmem:[%s799 + $0x8] sm:$0xff]
        %v866 = vld [vmem:[%s799 + $0x10] sm:$0xff]
        %v867 = vmul.f32 %v864, %v817
        %v868 = vmul.f32 %v865, %v817
        %v869 = vmul.f32 %v866, %v817
        %v870 = vsub.f32 %v867, %v818
        %v871 = vsub.f32 %v868, %v818
        %v872 = vsub.f32 %v869, %v818
        %v873 = vmax.f32 %v870, 0.0
        %v874 = vmax.f32 %v871, 0.0
        %v875 = vmax.f32 %v872, 0.0
        %876 = vst [vmem:[%s799] sm:$0xff] %v873
        %877 = vst [vmem:[%s799 + $0x8] sm:$0xff] %v874
        %878 = vst.msk [vmem:[%s799 + $0x10] sm:$0xff] %vm358, %v875
        %s879 = sand.u32 %s94, 1
        %s880 = scalar_lea.sflag [#allocation4], %s879
        %s881 = sand.u32 %s94, 1
        %s882 = smul.addr %s881, 96
        %s883 = scalar_lea.vmem [#allocation7], %s882
        // Predicated region
        $region37: #{tpu_custom_call.1} parent=27 // pred_check
          %p884 = pneg %p104
        $region38: #{tpu_custom_call.1} parent=27 // pred_check_branch
          %886 = sbr.rel (%p884) target = $region40
        $region39: #{tpu_custom_call.1} parent=27 // pred_region
          %888 = vsyncadd %s880, 0
          %s889 = smul.addr %s24, 3
          %s890 = smul.addr %s25, 12
          %s891 = sadd.s32 %s889, %s890
          %s892 = smul.addr %s891, 8
          %s893 = scalar_lea.hbm %s2, %s892
          %s894 = sshll.u32 %s883, 4
          %s895 = int_to_ptr.vmem [resolvable:$true] %s894
          %s896 = sshll.u32 %s893, 4
          %s897 = int_to_ptr.hbm [resolvable:$true] %s896
          %902 = dma.vmem_to_hbm [thread:$0]  %s895, 1536, %s897, %s880, 384, 384, 24
        $region40: #{tpu_custom_call.1} parent=27 // pred_fallthru
          _
      $region28: #{tpu_custom_call.1} parent=5 // pred_fallthru
        _
      %p903 = scmp.le.s32.totalorder 2, %s15
      // Predicated region
      $region41: #{tpu_custom_call.1} parent=5 // pred_check
        %p904 = pneg %p903
      $region42: #{tpu_custom_call.1} parent=5 // pred_check_branch
        %906 = sbr.rel (%p904) target = $region44
      $region43: #{tpu_custom_call.1} parent=5 // pred_region
        %s907 = ssub.s32 %s15, 2
        // Predicated region
        $region45: #{tpu_custom_call.1} parent=43 // pred_check
          %p908 = pneg %p110
        $region46: #{tpu_custom_call.1} parent=43 // pred_check_branch
          %910 = sbr.rel (%p908) target = $region48
        $region47: #{tpu_custom_call.1} parent=43 // pred_region
          %s911 = sand.u32 %s95, 1
          %s912 = scalar_lea.sflag [#allocation4], %s911
          %s913 = sand.u32 %s95, 1
          %s914 = smul.addr %s913, 96
          %s915 = scalar_lea.vmem [#allocation7], %s914
          %917 = dma.done %s912, 1536
        $region48: #{tpu_custom_call.1} parent=43 // pred_fallthru
          _
      $region44: #{tpu_custom_call.1} parent=5 // pred_fallthru
        _
    $region6: #{tpu_custom_call.1} parent=1 // loop_footer
      %s19 = sadd.s32 1, %s15
    $region7: #{tpu_custom_call.1} parent=1 // loop_footer_branch
      %14 = sbr.rel target = $region3
    $region8: #{tpu_custom_call.1} parent=1 // loop_exit
      _
    %918 = vsyncpa [#allocation3], 1
    %s919 = scalar_lea.sflag [#allocation3], 1
    %920 = vsyncpa %s919, 1
    %921 = vsyncpa [#allocation6], 1
    %922 = vsyncpa [#allocation4], 1
    %s923 = scalar_lea.sflag [#allocation4], 1
    %924 = vsyncpa %s923, 1

</llo_original>
